<compile_context>
chip_gen: v6e
topology: v6e:2x2x1
jax: 0.10.0
libtpu: 0.0.40
codegen_flags: <defaults>
</compile_context>

<pallas_src>
import jax
import jax.numpy as jnp
from jax.experimental import pallas as pl
from jax.experimental.pallas import tpu as pltpu

IN, H1, H2, H3 = 784, 256, 128, 64
OUT_PAD = 128  # lane-dense padded width of the final layer / output


def _leaky_relu(x, slope=0.2):
    return jnp.where(x > 0, x, slope * x)


def _round_up(x, m):
    return ((x + m - 1) // m) * m


def discriminator_kernel(x_ref,
                         w1_ref, b1_ref,
                         w2_ref, b2_ref,
                         w3_ref, b3_ref,
                         w4_ref, b4_ref,
                         o_ref):
    """Fused MLP forward for one (TB, 784) batch tile; all weights VMEM-resident."""
    x = x_ref[...]  # bf16 (TB, 784)

    # Linear(784, 256) + LeakyReLU(0.2)   (Dropout -> identity in eval mode)
    h = jnp.dot(x, w1_ref[...], preferred_element_type=jnp.float32) + b1_ref[...]
    h = _leaky_relu(h)

    # Linear(256, 128) + LeakyReLU(0.2)
    h = jnp.dot(h.astype(jnp.bfloat16), w2_ref[...],
                preferred_element_type=jnp.float32) + b2_ref[...]
    h = _leaky_relu(h)

    # Linear(128, 64) + LeakyReLU(0.2)
    h = jnp.dot(h.astype(jnp.bfloat16), w3_ref[...],
                preferred_element_type=jnp.float32) + b3_ref[...]
    h = _leaky_relu(h)

    # Linear(64, 1) + Sigmoid, computed lane-dense (1 -> 128 zero-padded cols)
    # so the output store is a full, unmasked (TB, 128) slab.
    logits = jnp.dot(h.astype(jnp.bfloat16), w4_ref[...],
                     preferred_element_type=jnp.float32) + b4_ref[...]
    o_ref[...] = jax.nn.sigmoid(logits)


def discriminator_forward(x, params, tb=1024):
    """x: (B, 784) float32 -> (B, 1) float32."""
    (w1, b1), (w2, b2), (w3, b3), (w4, b4) = params
    B = x.shape[0]

    # Batch tile: multiple of 8 sublanes, capped at `tb` (512-2048 is the sweet
    # spot for large B; fits comfortably in scoped VMEM on v5e/v6e/v7x).
    TB = min(tb, _round_up(B, 8))
    Bp = _round_up(B, TB)

    # bf16 operands for the MXU; pad the batch so every grid block is full.
    x_bf = x.astype(jnp.bfloat16)
    if Bp != B:
        x_bf = jnp.pad(x_bf, ((0, Bp - B), (0, 0)))
    w1b = w1.astype(jnp.bfloat16)
    w2b = w2.astype(jnp.bfloat16)
    w3b = w3.astype(jnp.bfloat16)
    # Zero-pad the 1-wide final layer to 128 lanes for an unmasked output store.
    w4p = jnp.pad(w4, ((0, 0), (0, OUT_PAD - w4.shape[1]))).astype(jnp.bfloat16)
    b4p = jnp.pad(b4, ((0, 0), (0, OUT_PAD - b4.shape[1]))).astype(jnp.float32)

    grid = (Bp // TB,)

    flops = 2 * Bp * (IN * H1 + H1 * H2 + H2 * H3 + H3 * OUT_PAD)
    bytes_accessed = (Bp * IN * 2                      # x (bf16)
                      + (w1b.size + w2b.size + w3b.size + w4p.size) * 2
                      + (b1.size + b2.size + b3.size + b4p.size) * 4
                      + Bp * OUT_PAD * 4)              # output (f32)

    out = pl.pallas_call(
        discriminator_kernel,
        out_shape=jax.ShapeDtypeStruct((Bp, OUT_PAD), jnp.float32),
        grid_spec=pltpu.PrefetchScalarGridSpec(
            num_scalar_prefetch=0,
            grid=grid,
            in_specs=[
                pl.BlockSpec((TB, IN), lambda i: (i, 0)),      # x: batch-tiled
                pl.BlockSpec((IN, H1), lambda i: (0, 0)),      # weights stay resident
                pl.BlockSpec((1, H1), lambda i: (0, 0)),
                pl.BlockSpec((H1, H2), lambda i: (0, 0)),
                pl.BlockSpec((1, H2), lambda i: (0, 0)),
                pl.BlockSpec((H2, H3), lambda i: (0, 0)),
                pl.BlockSpec((1, H3), lambda i: (0, 0)),
                pl.BlockSpec((H3, OUT_PAD), lambda i: (0, 0)),
                pl.BlockSpec((1, OUT_PAD), lambda i: (0, 0)),
            ],
            out_specs=pl.BlockSpec((TB, OUT_PAD), lambda i: (i, 0)),
        ),
        compiler_params=pltpu.CompilerParams(
            dimension_semantics=("parallel",),
            vmem_limit_bytes=64 << 20),
        cost_estimate=pl.CostEstimate(
            flops=flops,
            bytes_accessed=bytes_accessed,
            transcendentals=Bp * OUT_PAD),
    )(x_bf, w1b, b1, w2b, b2, w3b, b3, w4p, b4p)

    # Slice back to the logical (B, 1) output.
    return out[:B, :1]


def init_params(key):
    """Deterministic init mirroring torch.nn.Linear default (U[-1/sqrt(in), 1/sqrt(in)]).

    Weights stored as (in, out); biases as (1, out) for lane-major broadcast.
    """
    dims = [(IN, H1), (H1, H2), (H2, H3), (H3, 1)]
    params = []
    for (fan_in, fan_out) in dims:
        key, kw, kb = jax.random.split(key, 3)
        bound = 1.0 / (fan_in ** 0.5)
        w = jax.random.uniform(kw, (fan_in, fan_out), jnp.float32, -bound, bound)
        b = jax.random.uniform(kb, (1, fan_out), jnp.float32, -bound, bound)
        params.append((w, b))
    return params


def reference_forward(x, params):
    """Plain-JAX reference following the same bf16-matmul / f32-accumulate path."""
    h = x.astype(jnp.bfloat16)
    for i, (w, b) in enumerate(params):
        h = jnp.dot(h, w.astype(jnp.bfloat16),
                    preferred_element_type=jnp.float32) + b
        if i < 3:
            h = jnp.where(h > 0, h, 0.2 * h).astype(jnp.bfloat16)
    return jax.nn.sigmoid(h)


if __name__ == "__main__":
    key = jax.random.PRNGKey(0)
    key, kx = jax.random.split(key)

    B = 2
    x = jax.random.normal(kx, (B, IN), jnp.float32)  # flattened 28x28 MNIST-like input
    params = init_params(key)

    fwd = jax.jit(lambda xx: discriminator_forward(xx, params))
    out = jax.block_until_ready(fwd(x))

    ref = reference_forward(x, params)
    assert out.shape == (B, 1), out.shape
    assert jnp.allclose(out, ref, atol=2e-3, rtol=2e-3), (out, ref)

    print("KERNEL_OK")
</pallas_src>

<mosaic_0001>
module attributes {stable_mosaic.version = 11 : i64} {
  func.func @discriminator_kernel(%arg0: i32, %arg1: memref<8x784xbf16, #tpu.memory_space<vmem>>, %arg2: memref<784x256xbf16, #tpu.memory_space<vmem>>, %arg3: memref<1x256xf32, #tpu.memory_space<vmem>>, %arg4: memref<256x128xbf16, #tpu.memory_space<vmem>>, %arg5: memref<1x128xf32, #tpu.memory_space<vmem>>, %arg6: memref<128x64xbf16, #tpu.memory_space<vmem>>, %arg7: memref<1x64xf32, #tpu.memory_space<vmem>>, %arg8: memref<64x128xbf16, #tpu.memory_space<vmem>>, %arg9: memref<1x128xf32, #tpu.memory_space<vmem>>, %arg10: memref<8x128xf32, #tpu.memory_space<vmem>>) attributes {dimension_semantics = [#tpu.dimension_semantics<parallel>], iteration_bounds = array<i64: 1>, scalar_prefetch = 0 : i64, scratch_operands = 0 : i64, tpu.core_type = #tpu.core_type<tc>, window_params = [{transform_indices = @transform_0, window_bounds = array<i64: 8, 784>}, {pipeline_mode = #tpu.pipeline_mode<synchronous>, transform_indices = @transform_1, window_bounds = array<i64: 784, 256>}, {pipeline_mode = #tpu.pipeline_mode<synchronous>, transform_indices = @transform_2, window_bounds = array<i64: 1, 256>}, {pipeline_mode = #tpu.pipeline_mode<synchronous>, transform_indices = @transform_3, window_bounds = array<i64: 256, 128>}, {pipeline_mode = #tpu.pipeline_mode<synchronous>, transform_indices = @transform_4, window_bounds = array<i64: 1, 128>}, {pipeline_mode = #tpu.pipeline_mode<synchronous>, transform_indices = @transform_5, window_bounds = array<i64: 128, 64>}, {pipeline_mode = #tpu.pipeline_mode<synchronous>, transform_indices = @transform_6, window_bounds = array<i64: 1, 64>}, {pipeline_mode = #tpu.pipeline_mode<synchronous>, transform_indices = @transform_7, window_bounds = array<i64: 64, 128>}, {pipeline_mode = #tpu.pipeline_mode<synchronous>, transform_indices = @transform_8, window_bounds = array<i64: 1, 128>}, {transform_indices = @transform_9, window_bounds = array<i64: 8, 128>}]} {
    %c0 = arith.constant 0 : index
    %c0_0 = arith.constant 0 : index
    %0 = vector.load %arg1[%c0, %c0_0] : memref<8x784xbf16, #tpu.memory_space<vmem>>, vector<8x784xbf16>
    %c0_1 = arith.constant 0 : index
    %c0_2 = arith.constant 0 : index
    %1 = vector.load %arg2[%c0_1, %c0_2] : memref<784x256xbf16, #tpu.memory_space<vmem>>, vector<784x256xbf16>
    %cst = arith.constant dense<0.000000e+00> : vector<8x256xf32>
    %2 = tpu.matmul %0, %1, %cst {dimension_numbers = #tpu.dot_dimension_numbers<[1], [0], [0], [1], [0, 0, 1, 1], [], []>} : vector<8x784xbf16>, vector<784x256xbf16>, vector<8x256xf32> -> vector<8x256xf32>
    %c0_3 = arith.constant 0 : index
    %c0_4 = arith.constant 0 : index
    %3 = vector.load %arg3[%c0_3, %c0_4] : memref<1x256xf32, #tpu.memory_space<vmem>>, vector<1x256xf32>
    %4 = vector.broadcast %3 : vector<1x256xf32> to vector<8x256xf32>
    %5 = arith.addf %2, %4 : vector<8x256xf32>
    %cst_5 = arith.constant 0.000000e+00 : f32
    %6 = vector.broadcast %cst_5 : f32 to vector<8x256xf32>
    %7 = arith.cmpf ogt, %5, %6 : vector<8x256xf32>
    %cst_6 = arith.constant 2.000000e-01 : f32
    %8 = vector.broadcast %cst_6 : f32 to vector<8x256xf32>
    %9 = arith.mulf %8, %5 : vector<8x256xf32>
    %10 = arith.select %7, %5, %9 : vector<8x256xi1>, vector<8x256xf32>
    %11 = arith.truncf %10 : vector<8x256xf32> to vector<8x256xbf16>
    %c0_7 = arith.constant 0 : index
    %c0_8 = arith.constant 0 : index
    %12 = vector.load %arg4[%c0_7, %c0_8] : memref<256x128xbf16, #tpu.memory_space<vmem>>, vector<256x128xbf16>
    %cst_9 = arith.constant dense<0.000000e+00> : vector<8x128xf32>
    %13 = tpu.matmul %11, %12, %cst_9 {dimension_numbers = #tpu.dot_dimension_numbers<[1], [0], [0], [1], [0, 0, 1, 1], [], []>} : vector<8x256xbf16>, vector<256x128xbf16>, vector<8x128xf32> -> vector<8x128xf32>
    %c0_10 = arith.constant 0 : index
    %c0_11 = arith.constant 0 : index
    %14 = vector.load %arg5[%c0_10, %c0_11] : memref<1x128xf32, #tpu.memory_space<vmem>>, vector<1x128xf32>
    %15 = vector.broadcast %14 : vector<1x128xf32> to vector<8x128xf32>
    %16 = arith.addf %13, %15 : vector<8x128xf32>
    %cst_12 = arith.constant 0.000000e+00 : f32
    %17 = vector.broadcast %cst_12 : f32 to vector<8x128xf32>
    %18 = arith.cmpf ogt, %16, %17 : vector<8x128xf32>
    %cst_13 = arith.constant 2.000000e-01 : f32
    %19 = vector.broadcast %cst_13 : f32 to vector<8x128xf32>
    %20 = arith.mulf %19, %16 : vector<8x128xf32>
    %21 = arith.select %18, %16, %20 : vector<8x128xi1>, vector<8x128xf32>
    %22 = arith.truncf %21 : vector<8x128xf32> to vector<8x128xbf16>
    %c0_14 = arith.constant 0 : index
    %c0_15 = arith.constant 0 : index
    %23 = vector.load %arg6[%c0_14, %c0_15] : memref<128x64xbf16, #tpu.memory_space<vmem>>, vector<128x64xbf16>
    %cst_16 = arith.constant dense<0.000000e+00> : vector<8x64xf32>
    %24 = tpu.matmul %22, %23, %cst_16 {dimension_numbers = #tpu.dot_dimension_numbers<[1], [0], [0], [1], [0, 0, 1, 1], [], []>} : vector<8x128xbf16>, vector<128x64xbf16>, vector<8x64xf32> -> vector<8x64xf32>
    %c0_17 = arith.constant 0 : index
    %c0_18 = arith.constant 0 : index
    %25 = vector.load %arg7[%c0_17, %c0_18] : memref<1x64xf32, #tpu.memory_space<vmem>>, vector<1x64xf32>
    %26 = vector.broadcast %25 : vector<1x64xf32> to vector<8x64xf32>
    %27 = arith.addf %24, %26 : vector<8x64xf32>
    %cst_19 = arith.constant 0.000000e+00 : f32
    %28 = vector.broadcast %cst_19 : f32 to vector<8x64xf32>
    %29 = arith.cmpf ogt, %27, %28 : vector<8x64xf32>
    %cst_20 = arith.constant 2.000000e-01 : f32
    %30 = vector.broadcast %cst_20 : f32 to vector<8x64xf32>
    %31 = arith.mulf %30, %27 : vector<8x64xf32>
    %32 = arith.select %29, %27, %31 : vector<8x64xi1>, vector<8x64xf32>
    %33 = arith.truncf %32 : vector<8x64xf32> to vector<8x64xbf16>
    %c0_21 = arith.constant 0 : index
    %c0_22 = arith.constant 0 : index
    %34 = vector.load %arg8[%c0_21, %c0_22] : memref<64x128xbf16, #tpu.memory_space<vmem>>, vector<64x128xbf16>
    %cst_23 = arith.constant dense<0.000000e+00> : vector<8x128xf32>
    %35 = tpu.matmul %33, %34, %cst_23 {dimension_numbers = #tpu.dot_dimension_numbers<[1], [0], [0], [1], [0, 0, 1, 1], [], []>} : vector<8x64xbf16>, vector<64x128xbf16>, vector<8x128xf32> -> vector<8x128xf32>
    %c0_24 = arith.constant 0 : index
    %c0_25 = arith.constant 0 : index
    %36 = vector.load %arg9[%c0_24, %c0_25] : memref<1x128xf32, #tpu.memory_space<vmem>>, vector<1x128xf32>
    %37 = vector.broadcast %36 : vector<1x128xf32> to vector<8x128xf32>
    %38 = arith.addf %35, %37 : vector<8x128xf32>
    %39 = arith.negf %38 : vector<8x128xf32>
    %40 = math.exp %39 : vector<8x128xf32>
    %cst_26 = arith.constant 1.000000e+00 : f32
    %41 = vector.broadcast %cst_26 : f32 to vector<8x128xf32>
    %42 = arith.addf %41, %40 : vector<8x128xf32>
    %43 = arith.divf %41, %42 : vector<8x128xf32>
    %c0_27 = arith.constant 0 : index
    %c0_28 = arith.constant 0 : index
    %44 = vector.load %arg10[%c0_27, %c0_28] : memref<8x128xf32, #tpu.memory_space<vmem>>, vector<8x128xf32>
    tpu.vector_store %arg10[%c0_27, %c0_28], %43 {strides = array<i32>} : memref<8x128xf32, #tpu.memory_space<vmem>>, vector<8x128xf32>,
    return
  }
  func.func @transform_0(%arg0: i32) -> (i32, i32) {
    %c0_i32 = arith.constant 0 : i32
    %c0_i32_0 = arith.constant 0 : i32
    return %arg0, %c0_i32 : i32, i32
  }
  func.func @transform_1(%arg0: i32) -> (i32, i32) {
    %c0_i32 = arith.constant 0 : i32
    %c0_i32_0 = arith.constant 0 : i32
    %c0_i32_1 = arith.constant 0 : i32
    return %c0_i32, %c0_i32_0 : i32, i32
  }
  func.func @transform_2(%arg0: i32) -> (i32, i32) {
    %c0_i32 = arith.constant 0 : i32
    %c0_i32_0 = arith.constant 0 : i32
    %c0_i32_1 = arith.constant 0 : i32
    return %c0_i32, %c0_i32_0 : i32, i32
  }
  func.func @transform_3(%arg0: i32) -> (i32, i32) {
    %c0_i32 = arith.constant 0 : i32
    %c0_i32_0 = arith.constant 0 : i32
    %c0_i32_1 = arith.constant 0 : i32
    return %c0_i32, %c0_i32_0 : i32, i32
  }
  func.func @transform_4(%arg0: i32) -> (i32, i32) {
    %c0_i32 = arith.constant 0 : i32
    %c0_i32_0 = arith.constant 0 : i32
    %c0_i32_1 = arith.constant 0 : i32
    return %c0_i32, %c0_i32_0 : i32, i32
  }
  func.func @transform_5(%arg0: i32) -> (i32, i32) {
    %c0_i32 = arith.constant 0 : i32
    %c0_i32_0 = arith.constant 0 : i32
    %c0_i32_1 = arith.constant 0 : i32
    return %c0_i32, %c0_i32_0 : i32, i32
  }
  func.func @transform_6(%arg0: i32) -> (i32, i32) {
    %c0_i32 = arith.constant 0 : i32
    %c0_i32_0 = arith.constant 0 : i32
    %c0_i32_1 = arith.constant 0 : i32
    return %c0_i32, %c0_i32_0 : i32, i32
  }
  func.func @transform_7(%arg0: i32) -> (i32, i32) {
    %c0_i32 = arith.constant 0 : i32
    %c0_i32_0 = arith.constant 0 : i32
    %c0_i32_1 = arith.constant 0 : i32
    return %c0_i32, %c0_i32_0 : i32, i32
  }
  func.func @transform_8(%arg0: i32) -> (i32, i32) {
    %c0_i32 = arith.constant 0 : i32
    %c0_i32_0 = arith.constant 0 : i32
    %c0_i32_1 = arith.constant 0 : i32
    return %c0_i32, %c0_i32_0 : i32, i32
  }
  func.func @transform_9(%arg0: i32) -> (i32, i32) {
    %c0_i32 = arith.constant 0 : i32
    %c0_i32_0 = arith.constant 0 : i32
    return %arg0, %c0_i32 : i32, i32
  }
}

</mosaic_0001>

<llo_original>
// kernel: _lambda_.1
$region0: #{_lambda_.1}
  #allocation0 [shape = 'u32[]', space=smem, size = 0x4, offset = 0x4, fixed_abs, tag = 'smem constant byte address 0x4 - core index']
  #allocation1 [shape = 'u32[144,128]{1,0:T(1,128)}', space=vmem, size = 0x12000, scoped, tag = 'internal scratch']
  %s0 = inlined_call_operand.vmem [shape: bf16[8,784], index: 0, kind: input, shape index: {}]
  %s1 = inlined_call_operand.hbm [shape: bf16[784,256], index: 1, kind: input, shape index: {}]
  %s2 = inlined_call_operand.vmem [shape: f32[1,256], index: 2, kind: input, shape index: {}]
  %s3 = inlined_call_operand.hbm [shape: bf16[256,128], index: 3, kind: input, shape index: {}]
  %s4 = inlined_call_operand.vmem [shape: f32[1,128], index: 4, kind: input, shape index: {}]
  %s5 = inlined_call_operand.hbm [shape: bf16[128,64], index: 5, kind: input, shape index: {}]
  %s6 = inlined_call_operand.vmem [shape: f32[1,64], index: 6, kind: input, shape index: {}]
  %s7 = inlined_call_operand.vmem [shape: bf16[64,128], index: 7, kind: input, shape index: {}]
  %s8 = inlined_call_operand.vmem [shape: f32[1,128], index: 8, kind: input, shape index: {}]
  %s9 = inlined_call_operand.vmem [shape: f32[8,128], index: 9, kind: output, shape index: {}]
  %s10 = sld [smem:[#allocation0]]
  $region58: #{_lambda_.1} parent=0
    _
  %s12 = ssub.s32 1, %s10
  %s13 = scalar_select 0, %s12, %s10
  $region1: #{_lambda_.1} parent=0
    #allocation2 [shape = 'u8[401408]{0}', space=vmem, size = 0x62000, scoped, tag = 'input window, operand 1, single buffered']
    #allocation3 [shape = 's32[1]{0}', space=sflag, size = 0x4, scoped, tag = 'scoped memory for _lambda_.1']
    #allocation4 [shape = 'u8[65536]{0}', space=vmem, size = 0x10000, scoped, tag = 'input window, operand 3, single buffered']
    #allocation5 [shape = 's32[1]{0}', space=sflag, size = 0x4, scoped, tag = 'scoped memory for _lambda_.1']
    #allocation6 [shape = 'u8[32768]{0}', space=vmem, size = 0x8000, scoped, tag = 'input window, operand 5, single buffered']
    %14 = vsyncpa [#allocation3], 0
    %15 = vsyncpa [#allocation5], 0
    // Predicated region
    $region2: #{_lambda_.1} parent=1 // pred_check
      _
    $region3: #{_lambda_.1} parent=1 // pred_check_branch
      %17 = sbr.rel (0) target = $region5
    $region4: #{_lambda_.1} parent=1 // pred_region
      _
    $region5: #{_lambda_.1} parent=1 // pred_fallthru
      _
    // Predicated region
    $region6: #{_lambda_.1} parent=1 // pred_check
      _
    $region7: #{_lambda_.1} parent=1 // pred_check_branch
      %19 = sbr.rel (0) target = $region9
    $region8: #{_lambda_.1} parent=1 // pred_region
      %s21 = ssub.s32 12544, 12544
      %22 = vsyncadd [#allocation3], %s21
      %s23 = sshll.u32 [#allocation2], 4
      %s24 = int_to_ptr.vmem [resolvable:$true] %s23
      %29 = dma.hbm_to_vmem [thread:$0]  %s1, 12544, %s24, [#allocation3], 128, 128, 8
    $region9: #{_lambda_.1} parent=1 // pred_fallthru
      _
    // Predicated region
    $region10: #{_lambda_.1} parent=1 // pred_check
      _
    $region11: #{_lambda_.1} parent=1 // pred_check_branch
      %31 = sbr.rel (0) target = $region13
    $region12: #{_lambda_.1} parent=1 // pred_region
      _
    $region13: #{_lambda_.1} parent=1 // pred_fallthru
      _
    // Predicated region
    $region14: #{_lambda_.1} parent=1 // pred_check
      _
    $region15: #{_lambda_.1} parent=1 // pred_check_branch
      %33 = sbr.rel (0) target = $region17
    $region16: #{_lambda_.1} parent=1 // pred_region
      %s35 = ssub.s32 2048, 2048
      %36 = vsyncadd [#allocation5], %s35
      %s37 = sshll.u32 [#allocation4], 4
      %s38 = int_to_ptr.vmem [resolvable:$true] %s37
      %43 = dma.hbm_to_vmem [thread:$0]  %s3, 2048, %s38, [#allocation5], 64, 64, 4
    $region17: #{_lambda_.1} parent=1 // pred_fallthru
      _
    // Predicated region
    $region18: #{_lambda_.1} parent=1 // pred_check
      _
    $region19: #{_lambda_.1} parent=1 // pred_check_branch
      %45 = sbr.rel (0) target = $region21
    $region20: #{_lambda_.1} parent=1 // pred_region
      _
    $region21: #{_lambda_.1} parent=1 // pred_fallthru
      _
    // Predicated region
    $region22: #{_lambda_.1} parent=1 // pred_check
      _
    $region23: #{_lambda_.1} parent=1 // pred_check_branch
      %47 = sbr.rel (0) target = $region25
    $region24: #{_lambda_.1} parent=1 // pred_region
      %s49 = ssub.s32 1024, 1024
      %50 = vsyncadd [#allocation5], %s49
      %s51 = sshll.u32 [#allocation6], 4
      %s52 = int_to_ptr.vmem [resolvable:$true] %s51
      %57 = dma.hbm_to_vmem [thread:$0]  %s5, 1024, %s52, [#allocation5], 64, 64, 4
    $region25: #{_lambda_.1} parent=1 // pred_fallthru
      _
    // Predicated region
    $region26: #{_lambda_.1} parent=1 // pred_check
      _
    $region27: #{_lambda_.1} parent=1 // pred_check_branch
      %59 = sbr.rel (0) target = $region29
    $region28: #{_lambda_.1} parent=1 // pred_region
      _
    $region29: #{_lambda_.1} parent=1 // pred_fallthru
      _
    // Predicated region
    $region30: #{_lambda_.1} parent=1 // pred_check
      _
    $region31: #{_lambda_.1} parent=1 // pred_check_branch
      %61 = sbr.rel (0) target = $region33
    $region32: #{_lambda_.1} parent=1 // pred_region
      _
    $region33: #{_lambda_.1} parent=1 // pred_fallthru
      _
    // Predicated region
    $region34: #{_lambda_.1} parent=1 // pred_check
      _
    $region35: #{_lambda_.1} parent=1 // pred_check_branch
      %63 = sbr.rel (0) target = $region37
    $region36: #{_lambda_.1} parent=1 // pred_region
      _
    $region37: #{_lambda_.1} parent=1 // pred_fallthru
      _
    // Predicated region
    $region38: #{_lambda_.1} parent=1 // pred_check
      _
    $region39: #{_lambda_.1} parent=1 // pred_check_branch
      %65 = sbr.rel (0) target = $region41
    $region40: #{_lambda_.1} parent=1 // pred_region
      %66 = dma.done [#allocation3], 12544
    $region41: #{_lambda_.1} parent=1 // pred_fallthru
      _
    // Predicated region
    $region42: #{_lambda_.1} parent=1 // pred_check
      _
    $region43: #{_lambda_.1} parent=1 // pred_check_branch
      %68 = sbr.rel (0) target = $region45
    $region44: #{_lambda_.1} parent=1 // pred_region
      %69 = dma.done [#allocation5], 2048
    $region45: #{_lambda_.1} parent=1 // pred_fallthru
      _
    // Predicated region
    $region46: #{_lambda_.1} parent=1 // pred_check
      _
    $region47: #{_lambda_.1} parent=1 // pred_check_branch
      %71 = sbr.rel (0) target = $region49
    $region48: #{_lambda_.1} parent=1 // pred_region
      %72 = dma.done [#allocation5], 1024
    $region49: #{_lambda_.1} parent=1 // pred_fallthru
      _
    %v74 = vld [vmem:[%s0] sm:$0xff]
    %v75 = vld [vmem:[%s0 + $0x8] sm:$0xff]
    %v76 = vld [vmem:[%s0 + $0x10] sm:$0xff]
    %v77 = vld [vmem:[%s0 + $0x18] sm:$0xf]
    %v78 = vld [vmem:[#allocation2] sm:$0xff]
    %v79 = vld [vmem:[#allocation2 + $0x8] sm:$0xff]
    %v80 = vld [vmem:[#allocation2 + $0x10] sm:$0xff]
    %v81 = vld [vmem:[#allocation2 + $0x18] sm:$0xff]
    %v82 = vld [vmem:[#allocation2 + $0x20] sm:$0xff]
    %v83 = vld [vmem:[#allocation2 + $0x28] sm:$0xff]
    %v84 = vld [vmem:[#allocation2 + $0x30] sm:$0xff]
    %v85 = vld [vmem:[#allocation2 + $0x38] sm:$0xff]
    %v86 = vld [vmem:[#allocation2 + $0x40] sm:$0xff]
    %v87 = vld [vmem:[#allocation2 + $0x48] sm:$0xff]
    %v88 = vld [vmem:[#allocation2 + $0x50] sm:$0xff]
    %v89 = vld [vmem:[#allocation2 + $0x58] sm:$0xff]
    %v90 = vld [vmem:[#allocation2 + $0x60] sm:$0xff]
    %v91 = vld [vmem:[#allocation2 + $0x68] sm:$0xff]
    %v92 = vld [vmem:[#allocation2 + $0x70] sm:$0xff]
    %v93 = vld [vmem:[#allocation2 + $0x78] sm:$0xff]
    %v94 = vld [vmem:[#allocation2 + $0x80] sm:$0xff]
    %v95 = vld [vmem:[#allocation2 + $0x88] sm:$0xff]
    %v96 = vld [vmem:[#allocation2 + $0x90] sm:$0xff]
    %v97 = vld [vmem:[#allocation2 + $0x98] sm:$0xff]
    %v98 = vld [vmem:[#allocation2 + $0xa0] sm:$0xff]
    %v99 = vld [vmem:[#allocation2 + $0xa8] sm:$0xff]
    %v100 = vld [vmem:[#allocation2 + $0xb0] sm:$0xff]
    %v101 = vld [vmem:[#allocation2 + $0xb8] sm:$0xff]
    %v102 = vld [vmem:[#allocation2 + $0xc0] sm:$0xff]
    %v103 = vld [vmem:[#allocation2 + $0xc8] sm:$0xff]
    %v104 = vld [vmem:[#allocation2 + $0xd0] sm:$0xff]
    %v105 = vld [vmem:[#allocation2 + $0xd8] sm:$0xff]
    %v106 = vld [vmem:[#allocation2 + $0xe0] sm:$0xff]
    %v107 = vld [vmem:[#allocation2 + $0xe8] sm:$0xff]
    %v108 = vld [vmem:[#allocation2 + $0xf0] sm:$0xff]
    %v109 = vld [vmem:[#allocation2 + $0xf8] sm:$0xff]
    %v110 = vld [vmem:[#allocation2 + $0x100] sm:$0xff]
    %v111 = vld [vmem:[#allocation2 + $0x108] sm:$0xff]
    %v112 = vld [vmem:[#allocation2 + $0x110] sm:$0xff]
    %v113 = vld [vmem:[#allocation2 + $0x118] sm:$0xff]
    %v114 = vld [vmem:[#allocation2 + $0x120] sm:$0xff]
    %v115 = vld [vmem:[#allocation2 + $0x128] sm:$0xff]
    %v116 = vld [vmem:[#allocation2 + $0x130] sm:$0xff]
    %v117 = vld [vmem:[#allocation2 + $0x138] sm:$0xff]
    %v118 = vld [vmem:[#allocation2 + $0x140] sm:$0xff]
    %v119 = vld [vmem:[#allocation2 + $0x148] sm:$0xff]
    %v120 = vld [vmem:[#allocation2 + $0x150] sm:$0xff]
    %v121 = vld [vmem:[#allocation2 + $0x158] sm:$0xff]
    %v122 = vld [vmem:[#allocation2 + $0x160] sm:$0xff]
    %v123 = vld [vmem:[#allocation2 + $0x168] sm:$0xff]
    %v124 = vld [vmem:[#allocation2 + $0x170] sm:$0xff]
    %v125 = vld [vmem:[#allocation2 + $0x178] sm:$0xff]
    %v126 = vld [vmem:[#allocation2 + $0x180] sm:$0xff]
    %v127 = vld [vmem:[#allocation2 + $0x188] sm:$0xff]
    %v128 = vld [vmem:[#allocation2 + $0x190] sm:$0xff]
    %v129 = vld [vmem:[#allocation2 + $0x198] sm:$0xff]
    %v130 = vld [vmem:[#allocation2 + $0x1a0] sm:$0xff]
    %v131 = vld [vmem:[#allocation2 + $0x1a8] sm:$0xff]
    %v132 = vld [vmem:[#allocation2 + $0x1b0] sm:$0xff]
    %v133 = vld [vmem:[#allocation2 + $0x1b8] sm:$0xff]
    %v134 = vld [vmem:[#allocation2 + $0x1c0] sm:$0xff]
    %v135 = vld [vmem:[#allocation2 + $0x1c8] sm:$0xff]
    %v136 = vld [vmem:[#allocation2 + $0x1d0] sm:$0xff]
    %v137 = vld [vmem:[#allocation2 + $0x1d8] sm:$0xff]
    %v138 = vld [vmem:[#allocation2 + $0x1e0] sm:$0xff]
    %v139 = vld [vmem:[#allocation2 + $0x1e8] sm:$0xff]
    %v140 = vld [vmem:[#allocation2 + $0x1f0] sm:$0xff]
    %v141 = vld [vmem:[#allocation2 + $0x1f8] sm:$0xff]
    %v142 = vld [vmem:[#allocation2 + $0x200] sm:$0xff]
    %v143 = vld [vmem:[#allocation2 + $0x208] sm:$0xff]
    %v144 = vld [vmem:[#allocation2 + $0x210] sm:$0xff]
    %v145 = vld [vmem:[#allocation2 + $0x218] sm:$0xff]
    %v146 = vld [vmem:[#allocation2 + $0x220] sm:$0xff]
    %v147 = vld [vmem:[#allocation2 + $0x228] sm:$0xff]
    %v148 = vld [vmem:[#allocation2 + $0x230] sm:$0xff]
    %v149 = vld [vmem:[#allocation2 + $0x238] sm:$0xff]
    %v150 = vld [vmem:[#allocation2 + $0x240] sm:$0xff]
    %v151 = vld [vmem:[#allocation2 + $0x248] sm:$0xff]
    %v152 = vld [vmem:[#allocation2 + $0x250] sm:$0xff]
    %v153 = vld [vmem:[#allocation2 + $0x258] sm:$0xff]
    %v154 = vld [vmem:[#allocation2 + $0x260] sm:$0xff]
    %v155 = vld [vmem:[#allocation2 + $0x268] sm:$0xff]
    %v156 = vld [vmem:[#allocation2 + $0x270] sm:$0xff]
    %v157 = vld [vmem:[#allocation2 + $0x278] sm:$0xff]
    %v158 = vld [vmem:[#allocation2 + $0x280] sm:$0xff]
    %v159 = vld [vmem:[#allocation2 + $0x288] sm:$0xff]
    %v160 = vld [vmem:[#allocation2 + $0x290] sm:$0xff]
    %v161 = vld [vmem:[#allocation2 + $0x298] sm:$0xff]
    %v162 = vld [vmem:[#allocation2 + $0x2a0] sm:$0xff]
    %v163 = vld [vmem:[#allocation2 + $0x2a8] sm:$0xff]
    %v164 = vld [vmem:[#allocation2 + $0x2b0] sm:$0xff]
    %v165 = vld [vmem:[#allocation2 + $0x2b8] sm:$0xff]
    %v166 = vld [vmem:[#allocation2 + $0x2c0] sm:$0xff]
    %v167 = vld [vmem:[#allocation2 + $0x2c8] sm:$0xff]
    %v168 = vld [vmem:[#allocation2 + $0x2d0] sm:$0xff]
    %v169 = vld [vmem:[#allocation2 + $0x2d8] sm:$0xff]
    %v170 = vld [vmem:[#allocation2 + $0x2e0] sm:$0xff]
    %v171 = vld [vmem:[#allocation2 + $0x2e8] sm:$0xff]
    %v172 = vld [vmem:[#allocation2 + $0x2f0] sm:$0xff]
    %v173 = vld [vmem:[#allocation2 + $0x2f8] sm:$0xff]
    %v174 = vld [vmem:[#allocation2 + $0x300] sm:$0xff]
    %v175 = vld [vmem:[#allocation2 + $0x308] sm:$0xff]
    %v176 = vld [vmem:[%s2] sm:$0x3]
    %v178 = vlaneseq
    %v179 = vshrl.u32 %v178, 7
    %v180 = vsub.s32 0, %v179
    %v181 = vrot.slane %v176, %v180
    %v182 = vlaneseq
    %v183 = vshrl.u32 %v182, 7
    %v184 = vsub.s32 1, %v183
    %v185 = vrot.slane %v176, %v184
    %v192 = vunpack.c.l.b16 %v74
    %v193 = vunpack.c.h.b16 %v74
    %v194 = vunpack.c.l.b16 %v75
    %v195 = vunpack.c.h.b16 %v75
    %v196 = vunpack.c.l.b16 %v76
    %v197 = vunpack.c.h.b16 %v76
    %v198 = vunpack.c.l.b16 %v77
    %v199 = vpack.c.b16 %v192, %v192
    %v200 = vpack.c.b16 %v193, %v193
    %v201 = vpack.c.b16 %v194, %v194
    %v202 = vpack.c.b16 %v195, %v195
    %v203 = vpack.c.b16 %v196, %v196
    %v204 = vpack.c.b16 %v197, %v197
    %v205 = vpack.c.b16 %v198, %v198
    %v310 = vunpack.c.l.b16 %v78
    %v311 = vunpack.c.h.b16 %v78
    %v312 = vunpack.c.l.b16 %v79
    %v313 = vunpack.c.h.b16 %v79
    %v314 = vunpack.c.l.b16 %v80
    %v315 = vunpack.c.h.b16 %v80
    %v316 = vunpack.c.l.b16 %v81
    %v317 = vunpack.c.h.b16 %v81
    %v318 = vunpack.c.l.b16 %v82
    %v319 = vunpack.c.h.b16 %v82
    %v320 = vunpack.c.l.b16 %v83
    %v321 = vunpack.c.h.b16 %v83
    %v322 = vunpack.c.l.b16 %v84
    %v323 = vunpack.c.h.b16 %v84
    %v324 = vunpack.c.l.b16 %v85
    %v325 = vunpack.c.h.b16 %v85
    %v326 = vunpack.c.l.b16 %v86
    %v327 = vunpack.c.h.b16 %v86
    %v328 = vunpack.c.l.b16 %v87
    %v329 = vunpack.c.h.b16 %v87
    %v330 = vunpack.c.l.b16 %v88
    %v331 = vunpack.c.h.b16 %v88
    %v332 = vunpack.c.l.b16 %v89
    %v333 = vunpack.c.h.b16 %v89
    %v334 = vunpack.c.l.b16 %v90
    %v335 = vunpack.c.h.b16 %v90
    %v336 = vunpack.c.l.b16 %v91
    %v337 = vunpack.c.h.b16 %v91
    %v338 = vunpack.c.l.b16 %v92
    %v339 = vunpack.c.h.b16 %v92
    %v340 = vunpack.c.l.b16 %v93
    %v341 = vunpack.c.h.b16 %v93
    %v342 = vunpack.c.l.b16 %v94
    %v343 = vunpack.c.h.b16 %v94
    %v344 = vunpack.c.l.b16 %v95
    %v345 = vunpack.c.h.b16 %v95
    %v346 = vunpack.c.l.b16 %v96
    %v347 = vunpack.c.h.b16 %v96
    %v348 = vunpack.c.l.b16 %v97
    %v349 = vunpack.c.h.b16 %v97
    %v350 = vunpack.c.l.b16 %v98
    %v351 = vunpack.c.h.b16 %v98
    %v352 = vunpack.c.l.b16 %v99
    %v353 = vunpack.c.h.b16 %v99
    %v354 = vunpack.c.l.b16 %v100
    %v355 = vunpack.c.h.b16 %v100
    %v356 = vunpack.c.l.b16 %v101
    %v357 = vunpack.c.h.b16 %v101
    %v358 = vunpack.c.l.b16 %v102
    %v359 = vunpack.c.h.b16 %v102
    %v360 = vunpack.c.l.b16 %v103
    %v361 = vunpack.c.h.b16 %v103
    %v362 = vunpack.c.l.b16 %v104
    %v363 = vunpack.c.h.b16 %v104
    %v364 = vunpack.c.l.b16 %v105
    %v365 = vunpack.c.h.b16 %v105
    %v366 = vunpack.c.l.b16 %v106
    %v367 = vunpack.c.h.b16 %v106
    %v368 = vunpack.c.l.b16 %v107
    %v369 = vunpack.c.h.b16 %v107
    %v370 = vunpack.c.l.b16 %v108
    %v371 = vunpack.c.h.b16 %v108
    %v372 = vunpack.c.l.b16 %v109
    %v373 = vunpack.c.h.b16 %v109
    %v374 = vunpack.c.l.b16 %v110
    %v375 = vunpack.c.h.b16 %v110
    %v376 = vunpack.c.l.b16 %v111
    %v377 = vunpack.c.h.b16 %v111
    %v378 = vunpack.c.l.b16 %v112
    %v379 = vunpack.c.h.b16 %v112
    %v380 = vunpack.c.l.b16 %v113
    %v381 = vunpack.c.h.b16 %v113
    %v382 = vunpack.c.l.b16 %v114
    %v383 = vunpack.c.h.b16 %v114
    %v384 = vunpack.c.l.b16 %v115
    %v385 = vunpack.c.h.b16 %v115
    %v386 = vunpack.c.l.b16 %v116
    %v387 = vunpack.c.h.b16 %v116
    %v388 = vunpack.c.l.b16 %v117
    %v389 = vunpack.c.h.b16 %v117
    %v390 = vunpack.c.l.b16 %v118
    %v391 = vunpack.c.h.b16 %v118
    %v392 = vunpack.c.l.b16 %v119
    %v393 = vunpack.c.h.b16 %v119
    %v394 = vunpack.c.l.b16 %v120
    %v395 = vunpack.c.h.b16 %v120
    %v396 = vunpack.c.l.b16 %v121
    %v397 = vunpack.c.h.b16 %v121
    %v398 = vunpack.c.l.b16 %v122
    %v399 = vunpack.c.h.b16 %v122
    %v400 = vunpack.c.l.b16 %v123
    %v401 = vunpack.c.h.b16 %v123
    %v402 = vunpack.c.l.b16 %v124
    %v403 = vunpack.c.h.b16 %v124
    %v404 = vunpack.c.l.b16 %v125
    %v405 = vunpack.c.h.b16 %v125
    %v406 = vunpack.c.l.b16 %v126
    %v407 = vunpack.c.h.b16 %v126
    %v408 = vunpack.c.l.b16 %v127
    %v409 = vunpack.c.h.b16 %v127
    %v410 = vunpack.c.l.b16 %v128
    %v411 = vunpack.c.h.b16 %v128
    %v412 = vunpack.c.l.b16 %v129
    %v413 = vunpack.c.h.b16 %v129
    %v414 = vunpack.c.l.b16 %v130
    %v415 = vunpack.c.h.b16 %v130
    %v416 = vunpack.c.l.b16 %v131
    %v417 = vunpack.c.h.b16 %v131
    %v418 = vunpack.c.l.b16 %v132
    %v419 = vunpack.c.h.b16 %v132
    %v420 = vunpack.c.l.b16 %v133
    %v421 = vunpack.c.h.b16 %v133
    %v422 = vunpack.c.l.b16 %v134
    %v423 = vunpack.c.h.b16 %v134
    %v424 = vunpack.c.l.b16 %v135
    %v425 = vunpack.c.h.b16 %v135
    %v426 = vunpack.c.l.b16 %v136
    %v427 = vunpack.c.h.b16 %v136
    %v428 = vunpack.c.l.b16 %v137
    %v429 = vunpack.c.h.b16 %v137
    %v430 = vunpack.c.l.b16 %v138
    %v431 = vunpack.c.h.b16 %v138
    %v432 = vunpack.c.l.b16 %v139
    %v433 = vunpack.c.h.b16 %v139
    %v434 = vunpack.c.l.b16 %v140
    %v435 = vunpack.c.h.b16 %v140
    %v436 = vunpack.c.l.b16 %v141
    %v437 = vunpack.c.h.b16 %v141
    %v438 = vunpack.c.l.b16 %v142
    %v439 = vunpack.c.h.b16 %v142
    %v440 = vunpack.c.l.b16 %v143
    %v441 = vunpack.c.h.b16 %v143
    %v442 = vunpack.c.l.b16 %v144
    %v443 = vunpack.c.h.b16 %v144
    %v444 = vunpack.c.l.b16 %v145
    %v445 = vunpack.c.h.b16 %v145
    %v446 = vunpack.c.l.b16 %v146
    %v447 = vunpack.c.h.b16 %v146
    %v448 = vunpack.c.l.b16 %v147
    %v449 = vunpack.c.h.b16 %v147
    %v450 = vunpack.c.l.b16 %v148
    %v451 = vunpack.c.h.b16 %v148
    %v452 = vunpack.c.l.b16 %v149
    %v453 = vunpack.c.h.b16 %v149
    %v454 = vunpack.c.l.b16 %v150
    %v455 = vunpack.c.h.b16 %v150
    %v456 = vunpack.c.l.b16 %v151
    %v457 = vunpack.c.h.b16 %v151
    %v458 = vunpack.c.l.b16 %v152
    %v459 = vunpack.c.h.b16 %v152
    %v460 = vunpack.c.l.b16 %v153
    %v461 = vunpack.c.h.b16 %v153
    %v462 = vunpack.c.l.b16 %v154
    %v463 = vunpack.c.h.b16 %v154
    %v464 = vunpack.c.l.b16 %v155
    %v465 = vunpack.c.h.b16 %v155
    %v466 = vunpack.c.l.b16 %v156
    %v467 = vunpack.c.h.b16 %v156
    %v468 = vunpack.c.l.b16 %v157
    %v469 = vunpack.c.h.b16 %v157
    %v470 = vunpack.c.l.b16 %v158
    %v471 = vunpack.c.h.b16 %v158
    %v472 = vunpack.c.l.b16 %v159
    %v473 = vunpack.c.h.b16 %v159
    %v474 = vunpack.c.l.b16 %v160
    %v475 = vunpack.c.h.b16 %v160
    %v476 = vunpack.c.l.b16 %v161
    %v477 = vunpack.c.h.b16 %v161
    %v478 = vunpack.c.l.b16 %v162
    %v479 = vunpack.c.h.b16 %v162
    %v480 = vunpack.c.l.b16 %v163
    %v481 = vunpack.c.h.b16 %v163
    %v482 = vunpack.c.l.b16 %v164
    %v483 = vunpack.c.h.b16 %v164
    %v484 = vunpack.c.l.b16 %v165
    %v485 = vunpack.c.h.b16 %v165
    %v486 = vunpack.c.l.b16 %v166
    %v487 = vunpack.c.h.b16 %v166
    %v488 = vunpack.c.l.b16 %v167
    %v489 = vunpack.c.h.b16 %v167
    %v490 = vunpack.c.l.b16 %v168
    %v491 = vunpack.c.h.b16 %v168
    %v492 = vunpack.c.l.b16 %v169
    %v493 = vunpack.c.h.b16 %v169
    %v494 = vunpack.c.l.b16 %v170
    %v495 = vunpack.c.h.b16 %v170
    %v496 = vunpack.c.l.b16 %v171
    %v497 = vunpack.c.h.b16 %v171
    %v498 = vunpack.c.l.b16 %v172
    %v499 = vunpack.c.h.b16 %v172
    %v500 = vunpack.c.l.b16 %v173
    %v501 = vunpack.c.h.b16 %v173
    %v502 = vunpack.c.l.b16 %v174
    %v503 = vunpack.c.h.b16 %v174
    %v504 = vunpack.c.l.b16 %v175
    %v505 = vunpack.c.h.b16 %v175
    %v506 = vpack.c.b16 %v312, %v310
    %v507 = vpack.c.b16 %v313, %v311
    %v508 = vpack.c.b16 %v316, %v314
    %v509 = vpack.c.b16 %v317, %v315
    %v510 = vpack.c.b16 %v320, %v318
    %v511 = vpack.c.b16 %v321, %v319
    %v512 = vpack.c.b16 %v324, %v322
    %v513 = vpack.c.b16 %v325, %v323
    %v514 = vpack.c.b16 %v328, %v326
    %v515 = vpack.c.b16 %v329, %v327
    %v516 = vpack.c.b16 %v332, %v330
    %v517 = vpack.c.b16 %v333, %v331
    %v518 = vpack.c.b16 %v336, %v334
    %v519 = vpack.c.b16 %v337, %v335
    %v520 = vpack.c.b16 %v340, %v338
    %v521 = vpack.c.b16 %v341, %v339
    %v522 = vpack.c.b16 %v344, %v342
    %v523 = vpack.c.b16 %v345, %v343
    %v524 = vpack.c.b16 %v348, %v346
    %v525 = vpack.c.b16 %v349, %v347
    %v526 = vpack.c.b16 %v352, %v350
    %v527 = vpack.c.b16 %v353, %v351
    %v528 = vpack.c.b16 %v356, %v354
    %v529 = vpack.c.b16 %v357, %v355
    %v530 = vpack.c.b16 %v360, %v358
    %v531 = vpack.c.b16 %v361, %v359
    %v532 = vpack.c.b16 %v364, %v362
    %v533 = vpack.c.b16 %v365, %v363
    %v534 = vpack.c.b16 %v368, %v366
    %v535 = vpack.c.b16 %v369, %v367
    %v536 = vpack.c.b16 %v372, %v370
    %v537 = vpack.c.b16 %v373, %v371
    %v538 = vpack.c.b16 %v376, %v374
    %v539 = vpack.c.b16 %v377, %v375
    %v540 = vpack.c.b16 %v380, %v378
    %v541 = vpack.c.b16 %v381, %v379
    %v542 = vpack.c.b16 %v384, %v382
    %v543 = vpack.c.b16 %v385, %v383
    %v544 = vpack.c.b16 %v388, %v386
    %v545 = vpack.c.b16 %v389, %v387
    %v546 = vpack.c.b16 %v392, %v390
    %v547 = vpack.c.b16 %v393, %v391
    %v548 = vpack.c.b16 %v396, %v394
    %v549 = vpack.c.b16 %v397, %v395
    %v550 = vpack.c.b16 %v400, %v398
    %v551 = vpack.c.b16 %v401, %v399
    %v552 = vpack.c.b16 %v404, %v402
    %v553 = vpack.c.b16 %v405, %v403
    %v554 = vpack.c.b16 %v408, %v406
    %v555 = vpack.c.b16 %v409, %v407
    %v556 = vpack.c.b16 %v412, %v410
    %v557 = vpack.c.b16 %v413, %v411
    %v558 = vpack.c.b16 %v416, %v414
    %v559 = vpack.c.b16 %v417, %v415
    %v560 = vpack.c.b16 %v420, %v418
    %v561 = vpack.c.b16 %v421, %v419
    %v562 = vpack.c.b16 %v424, %v422
    %v563 = vpack.c.b16 %v425, %v423
    %v564 = vpack.c.b16 %v428, %v426
    %v565 = vpack.c.b16 %v429, %v427
    %v566 = vpack.c.b16 %v432, %v430
    %v567 = vpack.c.b16 %v433, %v431
    %v568 = vpack.c.b16 %v436, %v434
    %v569 = vpack.c.b16 %v437, %v435
    %v570 = vpack.c.b16 %v440, %v438
    %v571 = vpack.c.b16 %v441, %v439
    %v572 = vpack.c.b16 %v444, %v442
    %v573 = vpack.c.b16 %v445, %v443
    %v574 = vpack.c.b16 %v448, %v446
    %v575 = vpack.c.b16 %v449, %v447
    %v576 = vpack.c.b16 %v452, %v450
    %v577 = vpack.c.b16 %v453, %v451
    %v578 = vpack.c.b16 %v456, %v454
    %v579 = vpack.c.b16 %v457, %v455
    %v580 = vpack.c.b16 %v460, %v458
    %v581 = vpack.c.b16 %v461, %v459
    %v582 = vpack.c.b16 %v464, %v462
    %v583 = vpack.c.b16 %v465, %v463
    %v584 = vpack.c.b16 %v468, %v466
    %v585 = vpack.c.b16 %v469, %v467
    %v586 = vpack.c.b16 %v472, %v470
    %v587 = vpack.c.b16 %v473, %v471
    %v588 = vpack.c.b16 %v476, %v474
    %v589 = vpack.c.b16 %v477, %v475
    %v590 = vpack.c.b16 %v480, %v478
    %v591 = vpack.c.b16 %v481, %v479
    %v592 = vpack.c.b16 %v484, %v482
    %v593 = vpack.c.b16 %v485, %v483
    %v594 = vpack.c.b16 %v488, %v486
    %v595 = vpack.c.b16 %v489, %v487
    %v596 = vpack.c.b16 %v492, %v490
    %v597 = vpack.c.b16 %v493, %v491
    %v598 = vpack.c.b16 %v496, %v494
    %v599 = vpack.c.b16 %v497, %v495
    %v600 = vpack.c.b16 %v500, %v498
    %v601 = vpack.c.b16 %v501, %v499
    %v602 = vpack.c.b16 %v504, %v502
    %v603 = vpack.c.b16 %v505, %v503
    %vm702 = vcmask 130048
    %v704 = vsel %vm702, %v205, 0
    %706 = vmatprep.subr.bf16.mxu0 %v521
    %707 = vmatpush1.bf16.msra.mxu0 %v520
    %708 = vmatprep.subr.bf16.mxu0 %v519
    %709 = vmatpush1.bf16.msra.mxu0 %v518
    %710 = vmatprep.subr.bf16.mxu0 %v517
    %711 = vmatpush1.bf16.msra.mxu0 %v516
    %712 = vmatprep.subr.bf16.mxu0 %v515
    %713 = vmatpush1.bf16.msra.mxu0 %v514
    %714 = vmatprep.subr.bf16.mxu0 %v513
    %715 = vmatpush1.bf16.msra.mxu0 %v512
    %716 = vmatprep.subr.bf16.mxu0 %v511
    %717 = vmatpush1.bf16.msra.mxu0 %v510
    %718 = vmatprep.subr.bf16.mxu0 %v509
    %719 = vmatpush1.bf16.msra.mxu0 %v508
    %720 = vmatprep.subr.bf16.mxu0 %v507
    %721 = vmatpush1.bf16.msra.mxu0 %v506
    %722 = vmatprep.subr.bf16.mxu0 %v537
    %723 = vmatpush2.bf16.msra.mxu0 %v536
    %724 = vmatprep.subr.bf16.mxu0 %v535
    %725 = vmatpush2.bf16.msra.mxu0 %v534
    %726 = vmatprep.subr.bf16.mxu0 %v533
    %727 = vmatpush2.bf16.msra.mxu0 %v532
    %728 = vmatprep.subr.bf16.mxu0 %v531
    %729 = vmatpush2.bf16.msra.mxu0 %v530
    %730 = vmatprep.subr.bf16.mxu0 %v529
    %731 = vmatpush2.bf16.msra.mxu0 %v528
    %732 = vmatprep.subr.bf16.mxu0 %v527
    %733 = vmatpush2.bf16.msra.mxu0 %v526
    %734 = vmatprep.subr.bf16.mxu0 %v525
    %735 = vmatpush2.bf16.msra.mxu0 %v524
    %736 = vmatprep.subr.bf16.mxu0 %v523
    %737 = vmatpush2.bf16.msra.mxu0 %v522
    %738 = vmatprep.mubr.bf16.mxu0 %v200
    %739 = vmatmul.mubr.bf16.gmra.mxu0 %v199
    %v740 = vpop.f32.mrf.mxu0
    %v741 = vadd.f32 %v181, %v740
    %v742 = vpop.f32.mrf.mxu0
    %v743 = vadd.f32 %v185, %v742
    %v744 = vpop.f32.mrf.mxu0
    %v745 = vpop.f32.mrf.mxu0
    %746 = vdwg.mxu0
    %747 = vmatprep.subr.bf16.mxu0 %v553
    %748 = vmatpush1.bf16.msra.mxu0 %v552
    %749 = vmatprep.subr.bf16.mxu0 %v551
    %750 = vmatpush1.bf16.msra.mxu0 %v550
    %751 = vmatprep.subr.bf16.mxu0 %v549
    %752 = vmatpush1.bf16.msra.mxu0 %v548
    %753 = vmatprep.subr.bf16.mxu0 %v547
    %754 = vmatpush1.bf16.msra.mxu0 %v546
    %755 = vmatprep.subr.bf16.mxu0 %v545
    %756 = vmatpush1.bf16.msra.mxu0 %v544
    %757 = vmatprep.subr.bf16.mxu0 %v543
    %758 = vmatpush1.bf16.msra.mxu0 %v542
    %759 = vmatprep.subr.bf16.mxu0 %v541
    %760 = vmatpush1.bf16.msra.mxu0 %v540
    %761 = vmatprep.subr.bf16.mxu0 %v539
    %762 = vmatpush1.bf16.msra.mxu0 %v538
    %763 = vmatprep.subr.bf16.mxu0 %v569
    %764 = vmatpush2.bf16.msra.mxu0 %v568
    %765 = vmatprep.subr.bf16.mxu0 %v567
    %766 = vmatpush2.bf16.msra.mxu0 %v566
    %767 = vmatprep.subr.bf16.mxu0 %v565
    %768 = vmatpush2.bf16.msra.mxu0 %v564
    %769 = vmatprep.subr.bf16.mxu0 %v563
    %770 = vmatpush2.bf16.msra.mxu0 %v562
    %771 = vmatprep.subr.bf16.mxu0 %v561
    %772 = vmatpush2.bf16.msra.mxu0 %v560
    %773 = vmatprep.subr.bf16.mxu0 %v559
    %774 = vmatpush2.bf16.msra.mxu0 %v558
    %775 = vmatprep.subr.bf16.mxu0 %v557
    %776 = vmatpush2.bf16.msra.mxu0 %v556
    %777 = vmatprep.subr.bf16.mxu0 %v555
    %778 = vmatpush2.bf16.msra.mxu0 %v554
    %779 = vmatprep.mubr.bf16.mxu0 %v202
    %780 = vmatmul.mubr.bf16.gmra.mxu0 %v201
    %v781 = vpop.f32.mrf.mxu0
    %v782 = vadd.f32 %v741, %v781
    %v783 = vpop.f32.mrf.mxu0
    %v784 = vadd.f32 %v743, %v783
    %v785 = vpop.f32.mrf.mxu0
    %v786 = vpop.f32.mrf.mxu0
    %787 = vdwg.mxu0
    %788 = vmatprep.subr.bf16.mxu0 %v585
    %789 = vmatpush1.bf16.msra.mxu0 %v584
    %790 = vmatprep.subr.bf16.mxu0 %v583
    %791 = vmatpush1.bf16.msra.mxu0 %v582
    %792 = vmatprep.subr.bf16.mxu0 %v581
    %793 = vmatpush1.bf16.msra.mxu0 %v580
    %794 = vmatprep.subr.bf16.mxu0 %v579
    %795 = vmatpush1.bf16.msra.mxu0 %v578
    %796 = vmatprep.subr.bf16.mxu0 %v577
    %797 = vmatpush1.bf16.msra.mxu0 %v576
    %798 = vmatprep.subr.bf16.mxu0 %v575
    %799 = vmatpush1.bf16.msra.mxu0 %v574
    %800 = vmatprep.subr.bf16.mxu0 %v573
    %801 = vmatpush1.bf16.msra.mxu0 %v572
    %802 = vmatprep.subr.bf16.mxu0 %v571
    %803 = vmatpush1.bf16.msra.mxu0 %v570
    %804 = vmatprep.subr.bf16.mxu0 %v601
    %805 = vmatpush2.bf16.msra.mxu0 %v600
    %806 = vmatprep.subr.bf16.mxu0 %v599
    %807 = vmatpush2.bf16.msra.mxu0 %v598
    %808 = vmatprep.subr.bf16.mxu0 %v597
    %809 = vmatpush2.bf16.msra.mxu0 %v596
    %810 = vmatprep.subr.bf16.mxu0 %v595
    %811 = vmatpush2.bf16.msra.mxu0 %v594
    %812 = vmatprep.subr.bf16.mxu0 %v593
    %813 = vmatpush2.bf16.msra.mxu0 %v592
    %814 = vmatprep.subr.bf16.mxu0 %v591
    %815 = vmatpush2.bf16.msra.mxu0 %v590
    %816 = vmatprep.subr.bf16.mxu0 %v589
    %817 = vmatpush2.bf16.msra.mxu0 %v588
    %818 = vmatprep.subr.bf16.mxu0 %v587
    %819 = vmatpush2.bf16.msra.mxu0 %v586
    %820 = vmatprep.mubr.bf16.mxu0 %v204
    %821 = vmatmul.mubr.bf16.gmra.mxu0 %v203
    %v822 = vpop.f32.mrf.mxu0
    %v823 = vadd.f32 %v782, %v822
    %v824 = vpop.f32.mrf.mxu0
    %v825 = vadd.f32 %v784, %v824
    %v826 = vpop.f32.mrf.mxu0
    %v827 = vpop.f32.mrf.mxu0
    %828 = vdwg.mxu0
    %829 = vmatprep.subr.bf16.mxu0 0
    %830 = vmatpush1.bf16.msra.mxu0 0
    %831 = vmatprep.subr.bf16.mxu0 0
    %832 = vmatpush1.bf16.msra.mxu0 0
    %833 = vmatprep.subr.bf16.mxu0 0
    %834 = vmatpush1.bf16.msra.mxu0 0
    %835 = vmatprep.subr.bf16.mxu0 0
    %836 = vmatpush1.bf16.msra.mxu0 0
    %837 = vmatprep.subr.bf16.mxu0 0
    %838 = vmatpush1.bf16.msra.mxu0 0
    %839 = vmatprep.subr.bf16.mxu0 0
    %840 = vmatpush1.bf16.msra.mxu0 0
    %841 = vmatprep.subr.bf16.mxu0 0
    %842 = vmatpush1.bf16.msra.mxu0 0
    %843 = vmatprep.subr.bf16.mxu0 %v603
    %844 = vmatpush1.bf16.msra.mxu0 %v602
    %845 = vmatprep.subr.bf16.mxu0 0
    %846 = vmatpush2.bf16.msra.mxu0 0
    %847 = vmatprep.subr.bf16.mxu0 0
    %848 = vmatpush2.bf16.msra.mxu0 0
    %849 = vmatprep.subr.bf16.mxu0 0
    %850 = vmatpush2.bf16.msra.mxu0 0
    %851 = vmatprep.subr.bf16.mxu0 0
    %852 = vmatpush2.bf16.msra.mxu0 0
    %853 = vmatprep.subr.bf16.mxu0 0
    %854 = vmatpush2.bf16.msra.mxu0 0
    %855 = vmatprep.subr.bf16.mxu0 0
    %856 = vmatpush2.bf16.msra.mxu0 0
    %857 = vmatprep.subr.bf16.mxu0 0
    %858 = vmatpush2.bf16.msra.mxu0 0
    %859 = vmatprep.subr.bf16.mxu0 0
    %860 = vmatpush2.bf16.msra.mxu0 0
    %861 = vmatprep.mubr.bf16.mxu0 0
    %862 = vmatmul.mubr.bf16.gmra.mxu0 %v704
    %v863 = vpop.f32.mrf.mxu0
    %v864 = vadd.f32 %v823, %v863
    %v865 = vpop.f32.mrf.mxu0
    %v866 = vadd.f32 %v825, %v865
    %v867 = vpop.f32.mrf.mxu0
    %v868 = vpop.f32.mrf.mxu0
    %869 = vdwg.mxu0
    %vm870 = vcmp.gt.f32.partialorder %v864, 0.0
    %vm871 = vcmp.gt.f32.partialorder %v866, 0.0
    %v872 = vmul.f32 %v864, 0.2
    %v873 = vmul.f32 %v866, 0.2
    %v874 = vsel %vm870, %v864, %v872
    %v875 = vsel %vm871, %v866, %v873
    %v876 = vpack.c.bf16 %v874, %v874
    %v877 = vpack.c.bf16 %v875, %v875
    %v878 = vld [vmem:[#allocation4] sm:$0xf]
    %v879 = vld [vmem:[#allocation4 + $0x4] sm:$0xf]
    %v880 = vld [vmem:[#allocation4 + $0x8] sm:$0xf]
    %v881 = vld [vmem:[#allocation4 + $0xc] sm:$0xf]
    %v882 = vld [vmem:[#allocation4 + $0x10] sm:$0xf]
    %v883 = vld [vmem:[#allocation4 + $0x14] sm:$0xf]
    %v884 = vld [vmem:[#allocation4 + $0x18] sm:$0xf]
    %v885 = vld [vmem:[#allocation4 + $0x1c] sm:$0xf]
    %v886 = vld [vmem:[#allocation4 + $0x20] sm:$0xf]
    %v887 = vld [vmem:[#allocation4 + $0x24] sm:$0xf]
    %v888 = vld [vmem:[#allocation4 + $0x28] sm:$0xf]
    %v889 = vld [vmem:[#allocation4 + $0x2c] sm:$0xf]
    %v890 = vld [vmem:[#allocation4 + $0x30] sm:$0xf]
    %v891 = vld [vmem:[#allocation4 + $0x34] sm:$0xf]
    %v892 = vld [vmem:[#allocation4 + $0x38] sm:$0xf]
    %v893 = vld [vmem:[#allocation4 + $0x3c] sm:$0xf]
    %v894 = vld [vmem:[#allocation4 + $0x40] sm:$0xf]
    %v895 = vld [vmem:[#allocation4 + $0x44] sm:$0xf]
    %v896 = vld [vmem:[#allocation4 + $0x48] sm:$0xf]
    %v897 = vld [vmem:[#allocation4 + $0x4c] sm:$0xf]
    %v898 = vld [vmem:[#allocation4 + $0x50] sm:$0xf]
    %v899 = vld [vmem:[#allocation4 + $0x54] sm:$0xf]
    %v900 = vld [vmem:[#allocation4 + $0x58] sm:$0xf]
    %v901 = vld [vmem:[#allocation4 + $0x5c] sm:$0xf]
    %v902 = vld [vmem:[#allocation4 + $0x60] sm:$0xf]
    %v903 = vld [vmem:[#allocation4 + $0x64] sm:$0xf]
    %v904 = vld [vmem:[#allocation4 + $0x68] sm:$0xf]
    %v905 = vld [vmem:[#allocation4 + $0x6c] sm:$0xf]
    %v906 = vld [vmem:[#allocation4 + $0x70] sm:$0xf]
    %v907 = vld [vmem:[#allocation4 + $0x74] sm:$0xf]
    %v908 = vld [vmem:[#allocation4 + $0x78] sm:$0xf]
    %v909 = vld [vmem:[#allocation4 + $0x7c] sm:$0xf]
    %v910 = vld [vmem:[%s4] sm:$0x1]
    %v912 = vlaneseq
    %v913 = vshrl.u32 %v912, 7
    %v914 = vsub.s32 0, %v913
    %v915 = vrot.slane %v910, %v914
    %v949 = vunpack.c.l.b16 %v878
    %v950 = vunpack.c.l.b16 %v879
    %v951 = vunpack.c.l.b16 %v880
    %v952 = vunpack.c.l.b16 %v881
    %v953 = vunpack.c.l.b16 %v882
    %v954 = vunpack.c.l.b16 %v883
    %v955 = vunpack.c.l.b16 %v884
    %v956 = vunpack.c.l.b16 %v885
    %v957 = vunpack.c.l.b16 %v886
    %v958 = vunpack.c.l.b16 %v887
    %v959 = vunpack.c.l.b16 %v888
    %v960 = vunpack.c.l.b16 %v889
    %v961 = vunpack.c.l.b16 %v890
    %v962 = vunpack.c.l.b16 %v891
    %v963 = vunpack.c.l.b16 %v892
    %v964 = vunpack.c.l.b16 %v893
    %v965 = vunpack.c.l.b16 %v894
    %v966 = vunpack.c.l.b16 %v895
    %v967 = vunpack.c.l.b16 %v896
    %v968 = vunpack.c.l.b16 %v897
    %v969 = vunpack.c.l.b16 %v898
    %v970 = vunpack.c.l.b16 %v899
    %v971 = vunpack.c.l.b16 %v900
    %v972 = vunpack.c.l.b16 %v901
    %v973 = vunpack.c.l.b16 %v902
    %v974 = vunpack.c.l.b16 %v903
    %v975 = vunpack.c.l.b16 %v904
    %v976 = vunpack.c.l.b16 %v905
    %v977 = vunpack.c.l.b16 %v906
    %v978 = vunpack.c.l.b16 %v907
    %v979 = vunpack.c.l.b16 %v908
    %v980 = vunpack.c.l.b16 %v909
    %v981 = vpack.c.b16 %v950, %v949
    %v982 = vpack.c.b16 %v952, %v951
    %v983 = vpack.c.b16 %v954, %v953
    %v984 = vpack.c.b16 %v956, %v955
    %v985 = vpack.c.b16 %v958, %v957
    %v986 = vpack.c.b16 %v960, %v959
    %v987 = vpack.c.b16 %v962, %v961
    %v988 = vpack.c.b16 %v964, %v963
    %v989 = vpack.c.b16 %v966, %v965
    %v990 = vpack.c.b16 %v968, %v967
    %v991 = vpack.c.b16 %v970, %v969
    %v992 = vpack.c.b16 %v972, %v971
    %v993 = vpack.c.b16 %v974, %v973
    %v994 = vpack.c.b16 %v976, %v975
    %v995 = vpack.c.b16 %v978, %v977
    %v996 = vpack.c.b16 %v980, %v979
    %1013 = vmatprep.subr.bf16.mxu0 0
    %1014 = vmatpush1.bf16.msra.mxu0 %v988
    %1015 = vmatprep.subr.bf16.mxu0 0
    %1016 = vmatpush1.bf16.msra.mxu0 %v987
    %1017 = vmatprep.subr.bf16.mxu0 0
    %1018 = vmatpush1.bf16.msra.mxu0 %v986
    %1019 = vmatprep.subr.bf16.mxu0 0
    %1020 = vmatpush1.bf16.msra.mxu0 %v985
    %1021 = vmatprep.subr.bf16.mxu0 0
    %1022 = vmatpush1.bf16.msra.mxu0 %v984
    %1023 = vmatprep.subr.bf16.mxu0 0
    %1024 = vmatpush1.bf16.msra.mxu0 %v983
    %1025 = vmatprep.subr.bf16.mxu0 0
    %1026 = vmatpush1.bf16.msra.mxu0 %v982
    %1027 = vmatprep.subr.bf16.mxu0 0
    %1028 = vmatpush1.bf16.msra.mxu0 %v981
    %1029 = vmatprep.subr.bf16.mxu0 0
    %1030 = vmatpush2.bf16.msra.mxu0 %v996
    %1031 = vmatprep.subr.bf16.mxu0 0
    %1032 = vmatpush2.bf16.msra.mxu0 %v995
    %1033 = vmatprep.subr.bf16.mxu0 0
    %1034 = vmatpush2.bf16.msra.mxu0 %v994
    %1035 = vmatprep.subr.bf16.mxu0 0
    %1036 = vmatpush2.bf16.msra.mxu0 %v993
    %1037 = vmatprep.subr.bf16.mxu0 0
    %1038 = vmatpush2.bf16.msra.mxu0 %v992
    %1039 = vmatprep.subr.bf16.mxu0 0
    %1040 = vmatpush2.bf16.msra.mxu0 %v991
    %1041 = vmatprep.subr.bf16.mxu0 0
    %1042 = vmatpush2.bf16.msra.mxu0 %v990
    %1043 = vmatprep.subr.bf16.mxu0 0
    %1044 = vmatpush2.bf16.msra.mxu0 %v989
    %1045 = vmatprep.mubr.bf16.mxu0 %v877
    %1046 = vmatmul.mubr.bf16.gmra.mxu0 %v876
    %v1047 = vpop.f32.mrf.mxu0
    %v1048 = vadd.f32 %v915, %v1047
    %v1049 = vpop.f32.mrf.mxu0
    %v1050 = vpop.f32.mrf.mxu0
    %v1051 = vpop.f32.mrf.mxu0
    %1052 = vdwg.mxu0
    %vm1053 = vcmp.gt.f32.partialorder %v1048, 0.0
    %v1054 = vmul.f32 %v1048, 0.2
    %v1055 = vsel %vm1053, %v1048, %v1054
    %v1056 = vpack.c.bf16 %v1055, %v1055
    %v1057 = vld [vmem:[#allocation6] sm:$0xf]
    %v1058 = vld [vmem:[#allocation6 + $0x4] sm:$0xf]
    %v1059 = vld [vmem:[#allocation6 + $0x8] sm:$0xf]
    %v1060 = vld [vmem:[#allocation6 + $0xc] sm:$0xf]
    %v1061 = vld [vmem:[#allocation6 + $0x10] sm:$0xf]
    %v1062 = vld [vmem:[#allocation6 + $0x14] sm:$0xf]
    %v1063 = vld [vmem:[#allocation6 + $0x18] sm:$0xf]
    %v1064 = vld [vmem:[#allocation6 + $0x1c] sm:$0xf]
    %v1065 = vld [vmem:[#allocation6 + $0x20] sm:$0xf]
    %v1066 = vld [vmem:[#allocation6 + $0x24] sm:$0xf]
    %v1067 = vld [vmem:[#allocation6 + $0x28] sm:$0xf]
    %v1068 = vld [vmem:[#allocation6 + $0x2c] sm:$0xf]
    %v1069 = vld [vmem:[#allocation6 + $0x30] sm:$0xf]
    %v1070 = vld [vmem:[#allocation6 + $0x34] sm:$0xf]
    %v1071 = vld [vmem:[#allocation6 + $0x38] sm:$0xf]
    %v1072 = vld [vmem:[#allocation6 + $0x3c] sm:$0xf]
    %v1073 = vld [vmem:[%s6] sm:$0x1]
    %v1075 = vlaneseq
    %v1076 = vshrl.u32 %v1075, 7
    %v1077 = vsub.s32 0, %v1076
    %v1078 = vrot.slane %v1073, %v1077
    %v1096 = vunpack.c.l.b16 %v1057
    %v1097 = vunpack.c.l.b16 %v1058
    %v1098 = vunpack.c.l.b16 %v1059
    %v1099 = vunpack.c.l.b16 %v1060
    %v1100 = vunpack.c.l.b16 %v1061
    %v1101 = vunpack.c.l.b16 %v1062
    %v1102 = vunpack.c.l.b16 %v1063
    %v1103 = vunpack.c.l.b16 %v1064
    %v1104 = vunpack.c.l.b16 %v1065
    %v1105 = vunpack.c.l.b16 %v1066
    %v1106 = vunpack.c.l.b16 %v1067
    %v1107 = vunpack.c.l.b16 %v1068
    %v1108 = vunpack.c.l.b16 %v1069
    %v1109 = vunpack.c.l.b16 %v1070
    %v1110 = vunpack.c.l.b16 %v1071
    %v1111 = vunpack.c.l.b16 %v1072
    %v1112 = vpack.c.b16 %v1097, %v1096
    %v1113 = vpack.c.b16 %v1099, %v1098
    %v1114 = vpack.c.b16 %v1101, %v1100
    %v1115 = vpack.c.b16 %v1103, %v1102
    %v1116 = vpack.c.b16 %v1105, %v1104
    %v1117 = vpack.c.b16 %v1107, %v1106
    %v1118 = vpack.c.b16 %v1109, %v1108
    %v1119 = vpack.c.b16 %v1111, %v1110
    %1128 = vmatprep.subr.bf16.mxu0 0
    %1129 = vmatpush1.bf16.msra.mxu0 %v1119
    %1130 = vmatprep.subr.bf16.mxu0 0
    %1131 = vmatpush1.bf16.msra.mxu0 %v1118
    %1132 = vmatprep.subr.bf16.mxu0 0
    %1133 = vmatpush1.bf16.msra.mxu0 %v1117
    %1134 = vmatprep.subr.bf16.mxu0 0
    %1135 = vmatpush1.bf16.msra.mxu0 %v1116
    %1136 = vmatprep.subr.bf16.mxu0 0
    %1137 = vmatpush1.bf16.msra.mxu0 %v1115
    %1138 = vmatprep.subr.bf16.mxu0 0
    %1139 = vmatpush1.bf16.msra.mxu0 %v1114
    %1140 = vmatprep.subr.bf16.mxu0 0
    %1141 = vmatpush1.bf16.msra.mxu0 %v1113
    %1142 = vmatprep.subr.bf16.mxu0 0
    %1143 = vmatpush1.bf16.msra.mxu0 %v1112
    %1144 = vmatprep.subr.bf16.mxu0 0
    %1145 = vmatpush2.bf16.msra.mxu0 0
    %1146 = vmatprep.subr.bf16.mxu0 0
    %1147 = vmatpush2.bf16.msra.mxu0 0
    %1148 = vmatprep.subr.bf16.mxu0 0
    %1149 = vmatpush2.bf16.msra.mxu0 0
    %1150 = vmatprep.subr.bf16.mxu0 0
    %1151 = vmatpush2.bf16.msra.mxu0 0
    %1152 = vmatprep.subr.bf16.mxu0 0
    %1153 = vmatpush2.bf16.msra.mxu0 0
    %1154 = vmatprep.subr.bf16.mxu0 0
    %1155 = vmatpush2.bf16.msra.mxu0 0
    %1156 = vmatprep.subr.bf16.mxu0 0
    %1157 = vmatpush2.bf16.msra.mxu0 0
    %1158 = vmatprep.subr.bf16.mxu0 0
    %1159 = vmatpush2.bf16.msra.mxu0 0
    %1160 = vmatprep.mubr.bf16.mxu0 0
    %1161 = vmatmul.mubr.bf16.gmra.mxu0 %v1056
    %v1162 = vpop.f32.mrf.mxu0
    %v1163 = vadd.f32 %v1078, %v1162
    %v1164 = vpop.f32.mrf.mxu0
    %v1165 = vpop.f32.mrf.mxu0
    %v1166 = vpop.f32.mrf.mxu0
    %1167 = vdwg.mxu0
    %vm1168 = vcmp.gt.f32.partialorder %v1163, 0.0
    %v1169 = vmul.f32 %v1163, 0.2
    %v1170 = vsel %vm1168, %v1163, %v1169
    %v1171 = vpack.c.bf16 %v1170, %v1170
    %v1172 = vld [vmem:[%s7] sm:$0xf]
    %v1173 = vld [vmem:[%s7 + $0x4] sm:$0xf]
    %v1174 = vld [vmem:[%s7 + $0x8] sm:$0xf]
    %v1175 = vld [vmem:[%s7 + $0xc] sm:$0xf]
    %v1176 = vld [vmem:[%s7 + $0x10] sm:$0xf]
    %v1177 = vld [vmem:[%s7 + $0x14] sm:$0xf]
    %v1178 = vld [vmem:[%s7 + $0x18] sm:$0xf]
    %v1179 = vld [vmem:[%s7 + $0x1c] sm:$0xf]
    %v1180 = vld [vmem:[%s8] sm:$0x1]
    %v1182 = vlaneseq
    %v1183 = vshrl.u32 %v1182, 7
    %v1184 = vsub.s32 0, %v1183
    %v1185 = vrot.slane %v1180, %v1184
    %v1195 = vunpack.c.l.b16 %v1172
    %v1196 = vunpack.c.l.b16 %v1173
    %v1197 = vunpack.c.l.b16 %v1174
    %v1198 = vunpack.c.l.b16 %v1175
    %v1199 = vunpack.c.l.b16 %v1176
    %v1200 = vunpack.c.l.b16 %v1177
    %v1201 = vunpack.c.l.b16 %v1178
    %v1202 = vunpack.c.l.b16 %v1179
    %v1203 = vpack.c.b16 %v1196, %v1195
    %v1204 = vpack.c.b16 %v1198, %v1197
    %v1205 = vpack.c.b16 %v1200, %v1199
    %v1206 = vpack.c.b16 %v1202, %v1201
    %vm1211 = vcmask 523264
    %v1213 = vsel %vm1211, %v1171, 0
    %1215 = vmatprep.subr.bf16.mxu0 0
    %1216 = vmatpush1.bf16.msra.mxu0 0
    %1217 = vmatprep.subr.bf16.mxu0 0
    %1218 = vmatpush1.bf16.msra.mxu0 0
    %1219 = vmatprep.subr.bf16.mxu0 0
    %1220 = vmatpush1.bf16.msra.mxu0 0
    %1221 = vmatprep.subr.bf16.mxu0 0
    %1222 = vmatpush1.bf16.msra.mxu0 0
    %1223 = vmatprep.subr.bf16.mxu0 0
    %1224 = vmatpush1.bf16.msra.mxu0 %v1206
    %1225 = vmatprep.subr.bf16.mxu0 0
    %1226 = vmatpush1.bf16.msra.mxu0 %v1205
    %1227 = vmatprep.subr.bf16.mxu0 0
    %1228 = vmatpush1.bf16.msra.mxu0 %v1204
    %1229 = vmatprep.subr.bf16.mxu0 0
    %1230 = vmatpush1.bf16.msra.mxu0 %v1203
    %1231 = vmatprep.subr.bf16.mxu0 0
    %1232 = vmatpush2.bf16.msra.mxu0 0
    %1233 = vmatprep.subr.bf16.mxu0 0
    %1234 = vmatpush2.bf16.msra.mxu0 0
    %1235 = vmatprep.subr.bf16.mxu0 0
    %1236 = vmatpush2.bf16.msra.mxu0 0
    %1237 = vmatprep.subr.bf16.mxu0 0
    %1238 = vmatpush2.bf16.msra.mxu0 0
    %1239 = vmatprep.subr.bf16.mxu0 0
    %1240 = vmatpush2.bf16.msra.mxu0 0
    %1241 = vmatprep.subr.bf16.mxu0 0
    %1242 = vmatpush2.bf16.msra.mxu0 0
    %1243 = vmatprep.subr.bf16.mxu0 0
    %1244 = vmatpush2.bf16.msra.mxu0 0
    %1245 = vmatprep.subr.bf16.mxu0 0
    %1246 = vmatpush2.bf16.msra.mxu0 0
    %1247 = vmatprep.mubr.bf16.mxu0 0
    %1248 = vmatmul.mubr.bf16.gmra.mxu0 %v1213
    %v1249 = vpop.f32.mrf.mxu0
    %v1250 = vadd.f32 %v1185, %v1249
    %v1251 = vpop.f32.mrf.mxu0
    %v1252 = vpop.f32.mrf.mxu0
    %v1253 = vpop.f32.mrf.mxu0
    %1254 = vdwg.mxu0
    %v1255 = vxor.u32 %v1250, 2147483648
    %v1256 = vmul.f32 %v1255, 1.442695
    %v1257 = vpow.pop %v1256
    %v1258 = vadd.f32 %v1257, 1.0
    %v1259 = vrcp.pop %v1258
    %v1260 = vmul.f32 1.0, %v1259
    %1261 = vst [vmem:[%s9] sm:$0xff] %v1260
    // Predicated region
    $region50: #{_lambda_.1} parent=1 // pred_check
      _
    $region51: #{_lambda_.1} parent=1 // pred_check_branch
      %1263 = sbr.rel (0) target = $region53
    $region52: #{_lambda_.1} parent=1 // pred_region
      _
    $region53: #{_lambda_.1} parent=1 // pred_fallthru
      _
    // Predicated region
    $region54: #{_lambda_.1} parent=1 // pred_check
      _
    $region55: #{_lambda_.1} parent=1 // pred_check_branch
      %1265 = sbr.rel (0) target = $region57
    $region56: #{_lambda_.1} parent=1 // pred_region
      _
    $region57: #{_lambda_.1} parent=1 // pred_fallthru
      _
    %1266 = vsyncpa [#allocation3], 1
    %1267 = vsyncpa [#allocation5], 1

</llo_original>
